<compile_context>
chip_gen: v5e
topology: v5e:2x2
jax: 0.10.0
libtpu: 0.0.40
codegen_flags: <defaults>
</compile_context>

<pallas_src>
import functools

import jax
import jax.numpy as jnp
from jax import lax
from jax.experimental import pallas as pl
from jax.experimental.pallas import tpu as pltpu


def _label_smoothing_kernel(x_ref, t_ref, o_ref, acc_ref, *, eps, ignore_index,
                            n_total, padded):
    # x_ref : (TILE_N, C) logits tile in VMEM (native dtype, cast here)
    # t_ref : (TILE_N, 1) int32 targets tile in VMEM
    # o_ref : (1, 1) f32 scalar loss in SMEM
    # acc_ref: SMEM f32[3] = [sum(log_preds), nll_numerator, nll_valid_count]
    i = pl.program_id(0)

    @pl.when(i == 0)
    def _init():
        acc_ref[0] = jnp.float32(0.0)
        acc_ref[1] = jnp.float32(0.0)
        acc_ref[2] = jnp.float32(0.0)

    x = x_ref[...].astype(jnp.float32)          # (TILE_N, C)
    t = t_ref[...]                              # (TILE_N, 1) int32
    tn, c = x.shape

    if padded:
        # Last tile may read past N: mask garbage rows BEFORE any arithmetic
        # so NaN/Inf bit patterns in padding can never propagate.
        row_ids = i * tn + lax.broadcasted_iota(jnp.int32, (tn, 1), 0)
        row_ok_b = row_ids < n_total                         # (TILE_N, 1) bool
        x = jnp.where(row_ok_b, x, 0.0)
        row_ok = row_ok_b.astype(jnp.float32)
        valid_b = jnp.logical_and(t != ignore_index, row_ok_b)
    else:
        row_ok = None
        valid_b = t != ignore_index

    # --- numerically stable log-softmax pieces (no log_preds tensor) ---
    m = jnp.max(x, axis=-1, keepdims=True)                         # (TILE_N, 1)
    shifted = x - m                                                # (TILE_N, C)
    lse = jnp.log(jnp.sum(jnp.exp(shifted), axis=-1, keepdims=True))  # (TILE_N, 1)

    # sum_j log_preds[r, j] = sum_j shifted[r, j] - C * lse[r]
    row_sum_shifted = jnp.sum(shifted, axis=-1, keepdims=True)     # (TILE_N, 1)
    row_sum_lp = row_sum_shifted - jnp.float32(c) * lse            # (TILE_N, 1)

    # log_preds[r, target[r]] = shifted[r, target[r]] - lse[r]
    col = lax.broadcasted_iota(jnp.int32, (tn, c), 1)              # (TILE_N, C)
    picked_shifted = jnp.sum(jnp.where(col == t, shifted, 0.0),
                             axis=-1, keepdims=True)               # (TILE_N, 1)
    picked_lp = picked_shifted - lse                               # (TILE_N, 1)

    valid = valid_b.astype(jnp.float32)                            # (TILE_N, 1)

    if padded:
        tile_sum_lp = jnp.sum(row_sum_lp * row_ok)
    else:
        tile_sum_lp = jnp.sum(row_sum_lp)
    tile_nll_num = -jnp.sum(picked_lp * valid)
    tile_nll_den = jnp.sum(valid)

    acc_ref[0] += tile_sum_lp
    acc_ref[1] += tile_nll_num
    acc_ref[2] += tile_nll_den

    @pl.when(i == pl.num_programs(0) - 1)
    def _finish():
        smooth_loss = -acc_ref[0] / jnp.float32(n_total)
        # 0/0 -> NaN when every target is ignore_index, matching PyTorch
        # nll_loss(reduction='mean') semantics.
        nll = acc_ref[1] / acc_ref[2]
        o_ref[0, 0] = (smooth_loss * jnp.float32(eps / c)
                       + jnp.float32(1.0 - eps) * nll)


def label_smoothing_loss(output, target, *, eps=0.1, ignore_index=-100,
                         tile_n=None):
    """output: (N, C) float (any float dtype); target: (N,) int. Scalar f32 loss."""
    n, c = output.shape
    target2d = target.astype(jnp.int32).reshape(n, 1)

    if tile_n is None:
        # ~1M logits elements per tile (~4 MiB of f32 compute intermediates).
        # Double-buffered input tiles + intermediates stay well under the
        # 32 MiB scoped-VMEM default on all generations (incl. v7x 64 MiB).
        budget_elems = 1 << 20
        tile_n = max(8, (budget_elems // max(c, 1)) // 8 * 8)
        tile_n = min(tile_n, 1024)
    if tile_n >= n:
        tile_n = n                        # single full-extent block (layout-legal)
    else:
        tile_n = max(8, (tile_n // 8) * 8)  # sublane-aligned block height

    num_tiles = pl.cdiv(n, tile_n)
    padded = (n % tile_n) != 0

    kernel = functools.partial(
        _label_smoothing_kernel,
        eps=float(eps),
        ignore_index=int(ignore_index),
        n_total=int(n),
        padded=bool(padded),
    )

    cost = pl.CostEstimate(
        flops=6 * n * c,
        transcendentals=n * c,
        bytes_accessed=n * c * output.dtype.itemsize + n * 4 + 4,
    )

    out = pl.pallas_call(
        kernel,
        out_shape=jax.ShapeDtypeStruct((1, 1), jnp.float32),
        grid_spec=pltpu.PrefetchScalarGridSpec(
            num_scalar_prefetch=0,
            grid=(num_tiles,),
            in_specs=[
                pl.BlockSpec((tile_n, c), lambda i: (i, 0)),   # logits tile
                pl.BlockSpec((tile_n, 1), lambda i: (i, 0)),   # targets tile
            ],
            out_specs=pl.BlockSpec(memory_space=pltpu.MemorySpace.SMEM),
            scratch_shapes=[pltpu.SMEM((3,), jnp.float32)],
        ),
        compiler_params=pltpu.CompilerParams(
            dimension_semantics=("arbitrary",)),
        cost_estimate=cost,
    )(output, target2d)
    return out[0, 0]


def _reference(output, target, *, eps=0.1, ignore_index=-100):
    # Pure-JAX reference mirroring the PyTorch module.
    output = output.astype(jnp.float32)
    c = output.shape[-1]
    log_preds = jax.nn.log_softmax(output, axis=-1)
    loss = -log_preds.sum(axis=-1).mean()
    valid = target != ignore_index
    picked = jnp.take_along_axis(
        log_preds, target[:, None].astype(jnp.int32), axis=-1)[:, 0]
    nll = -(jnp.where(valid, picked, 0.0).sum()) / valid.sum()
    return loss * eps / c + (1.0 - eps) * nll


if __name__ == "__main__":
    key = jax.random.PRNGKey(0)
    k1, k2 = jax.random.split(key)
    N, C = 20, 32
    logits = jax.random.normal(k1, (N, C), dtype=jnp.float32)
    targets = jax.random.randint(k2, (N,), 0, C, dtype=jnp.int32)
    # Exercise ignore_index on a couple of rows.
    targets = targets.at[3].set(-100)
    targets = targets.at[17].set(-100)

    # f32 path with an explicit small tile -> 3-step grid with a ragged
    # (masked) last tile, exercising the SMEM accumulator pipeline.
    loss = label_smoothing_loss(logits, targets, eps=0.1, ignore_index=-100,
                                tile_n=8)
    jax.block_until_ready(loss)
    ref = _reference(logits, targets, eps=0.1, ignore_index=-100)
    assert jnp.allclose(loss, ref, rtol=1e-4, atol=1e-4), (loss, ref)

    # bf16 logits streamed natively (no wrapper upcast), default single block.
    logits_bf16 = logits.astype(jnp.bfloat16)
    loss_bf16 = label_smoothing_loss(logits_bf16, targets, eps=0.1,
                                     ignore_index=-100)
    jax.block_until_ready(loss_bf16)
    ref_bf16 = _reference(logits_bf16, targets, eps=0.1, ignore_index=-100)
    assert jnp.allclose(loss_bf16, ref_bf16, rtol=1e-3, atol=1e-3), (
        loss_bf16, ref_bf16)

    print("KERNEL_OK")
</pallas_src>

<mosaic_0001>
module attributes {stable_mosaic.version = 11 : i64} {
  func.func @_label_smoothing_kernel(%arg0: i32, %arg1: memref<8x32xf32, #tpu.memory_space<vmem>>, %arg2: memref<8x1xi32, #tpu.memory_space<vmem>>, %arg3: memref<1x1xf32, #tpu.memory_space<smem>>, %arg4: memref<3xf32, #tpu.memory_space<smem>>) attributes {dimension_semantics = [#tpu.dimension_semantics<arbitrary>], iteration_bounds = array<i64: 3>, scalar_prefetch = 0 : i64, scratch_operands = 1 : i64, tpu.core_type = #tpu.core_type<tc>, window_params = [{transform_indices = @transform_0, window_bounds = array<i64: 8, 32>}, {transform_indices = @transform_1, window_bounds = array<i64: 8, 1>}, {transform_indices = @transform_2, window_bounds = array<i64: 1, 1>}]} {
    %c0_i32 = arith.constant 0 : i32
    %0 = arith.cmpi eq, %arg0, %c0_i32 : i32
    %1 = arith.extui %0 : i1 to i32
    %c0_i32_0 = arith.constant 0 : i32
    %2 = arith.cmpi ne, %1, %c0_i32_0 : i32
    scf.if %2 {
      %cst_19 = arith.constant 0.000000e+00 : f32
      %c0_20 = arith.constant 0 : index
      %70 = memref.load %arg4[%c0_20] : memref<3xf32, #tpu.memory_space<smem>>
      memref.store %cst_19, %arg4[%c0_20] : memref<3xf32, #tpu.memory_space<smem>>
      %cst_21 = arith.constant 0.000000e+00 : f32
      %c1_22 = arith.constant 1 : index
      %71 = memref.load %arg4[%c1_22] : memref<3xf32, #tpu.memory_space<smem>>
      memref.store %cst_21, %arg4[%c1_22] : memref<3xf32, #tpu.memory_space<smem>>
      %cst_23 = arith.constant 0.000000e+00 : f32
      %c2_24 = arith.constant 2 : index
      %72 = memref.load %arg4[%c2_24] : memref<3xf32, #tpu.memory_space<smem>>
      memref.store %cst_23, %arg4[%c2_24] : memref<3xf32, #tpu.memory_space<smem>>
    } else {
    }
    %c0 = arith.constant 0 : index
    %c0_1 = arith.constant 0 : index
    %3 = vector.load %arg1[%c0, %c0_1] : memref<8x32xf32, #tpu.memory_space<vmem>>, vector<8x32xf32>
    %c0_2 = arith.constant 0 : index
    %c0_3 = arith.constant 0 : index
    %4 = vector.load %arg2[%c0_2, %c0_3] : memref<8x1xi32, #tpu.memory_space<vmem>>, vector<8x1xi32>
    %c8_i32 = arith.constant 8 : i32
    %5 = arith.muli %arg0, %c8_i32 : i32
    %6 = tpu.iota {dimensions = array<i32: 0>} : vector<8x1xi32>
    %7 = vector.broadcast %5 : i32 to vector<8x1xi32>
    %8 = arith.addi %7, %6 : vector<8x1xi32>
    %c20_i32 = arith.constant 20 : i32
    %9 = vector.broadcast %c20_i32 : i32 to vector<8x1xi32>
    %10 = arith.cmpi slt, %8, %9 : vector<8x1xi32>
    %cst = arith.constant 0.000000e+00 : f32
    %11 = vector.shape_cast %10 : vector<8x1xi1> to vector<8x1xi1>
    %12 = vector.broadcast %11 : vector<8x1xi1> to vector<8x32xi1>
    %13 = vector.broadcast %cst : f32 to vector<8x32xf32>
    %14 = arith.select %12, %3, %13 : vector<8x32xi1>, vector<8x32xf32>
    %15 = arith.extui %10 : vector<8x1xi1> to vector<8x1xi32>
    %16 = arith.sitofp %15 : vector<8x1xi32> to vector<8x1xf32>
    %c-100_i32 = arith.constant -100 : i32
    %17 = vector.broadcast %c-100_i32 : i32 to vector<8x1xi32>
    %18 = arith.cmpi ne, %4, %17 : vector<8x1xi32>
    %19 = arith.andi %18, %10 : vector<8x1xi1>
    %cst_4 = arith.constant dense<0xFF800000> : vector<8xf32>
    %20 = vector.multi_reduction <maximumf>, %14, %cst_4 [1] : vector<8x32xf32> to vector<8xf32>
    %21 = vector.shape_cast %20 : vector<8xf32> to vector<8x1xf32>
    %22 = vector.broadcast %21 : vector<8x1xf32> to vector<8x32xf32>
    %23 = arith.subf %14, %22 : vector<8x32xf32>
    %24 = math.exp %23 : vector<8x32xf32>
    %cst_5 = arith.constant dense<0.000000e+00> : vector<8xf32>
    %25 = vector.multi_reduction <add>, %24, %cst_5 [1] : vector<8x32xf32> to vector<8xf32>
    %26 = vector.shape_cast %25 : vector<8xf32> to vector<8x1xf32>
    %27 = math.log %26 : vector<8x1xf32>
    %cst_6 = arith.constant dense<0.000000e+00> : vector<8xf32>
    %28 = vector.multi_reduction <add>, %23, %cst_6 [1] : vector<8x32xf32> to vector<8xf32>
    %29 = vector.shape_cast %28 : vector<8xf32> to vector<8x1xf32>
    %cst_7 = arith.constant 3.200000e+01 : f32
    %30 = vector.broadcast %cst_7 : f32 to vector<8x1xf32>
    %31 = arith.mulf %30, %27 : vector<8x1xf32>
    %32 = arith.subf %29, %31 : vector<8x1xf32>
    %33 = tpu.iota {dimensions = array<i32: 1>} : vector<8x32xi32>
    %34 = vector.broadcast %4 : vector<8x1xi32> to vector<8x32xi32>
    %35 = arith.cmpi eq, %33, %34 : vector<8x32xi32>
    %cst_8 = arith.constant 0.000000e+00 : f32
    %36 = vector.broadcast %cst_8 : f32 to vector<8x32xf32>
    %37 = arith.select %35, %23, %36 : vector<8x32xi1>, vector<8x32xf32>
    %cst_9 = arith.constant dense<0.000000e+00> : vector<8xf32>
    %38 = vector.multi_reduction <add>, %37, %cst_9 [1] : vector<8x32xf32> to vector<8xf32>
    %39 = vector.shape_cast %38 : vector<8xf32> to vector<8x1xf32>
    %40 = arith.subf %39, %27 : vector<8x1xf32>
    %41 = arith.extui %19 : vector<8x1xi1> to vector<8x1xi32>
    %42 = arith.sitofp %41 : vector<8x1xi32> to vector<8x1xf32>
    %43 = arith.mulf %32, %16 : vector<8x1xf32>
    %44 = vector.shape_cast %43 : vector<8x1xf32> to vector<1x8x1xf32>
    %cst_10 = arith.constant dense<0.000000e+00> : vector<1xf32>
    %45 = vector.multi_reduction <add>, %44, %cst_10 [1, 2] : vector<1x8x1xf32> to vector<1xf32>
    %46 = vector.shape_cast %45 : vector<1xf32> to vector<1x1x1xf32>
    %47 = vector.extract %46[0, 0, 0] : f32 from vector<1x1x1xf32>
    %48 = arith.mulf %40, %42 : vector<8x1xf32>
    %49 = vector.shape_cast %48 : vector<8x1xf32> to vector<1x8x1xf32>
    %cst_11 = arith.constant dense<0.000000e+00> : vector<1xf32>
    %50 = vector.multi_reduction <add>, %49, %cst_11 [1, 2] : vector<1x8x1xf32> to vector<1xf32>
    %51 = vector.shape_cast %50 : vector<1xf32> to vector<1x1x1xf32>
    %52 = vector.extract %51[0, 0, 0] : f32 from vector<1x1x1xf32>
    %cst_12 = arith.constant 0.000000e+00 : f32
    %53 = arith.subf %cst_12, %52 : f32
    %54 = vector.shape_cast %42 : vector<8x1xf32> to vector<1x8x1xf32>
    %cst_13 = arith.constant dense<0.000000e+00> : vector<1xf32>
    %55 = vector.multi_reduction <add>, %54, %cst_13 [1, 2] : vector<1x8x1xf32> to vector<1xf32>
    %56 = vector.shape_cast %55 : vector<1xf32> to vector<1x1x1xf32>
    %57 = vector.extract %56[0, 0, 0] : f32 from vector<1x1x1xf32>
    %c0_14 = arith.constant 0 : index
    %58 = memref.load %arg4[%c0_14] : memref<3xf32, #tpu.memory_space<smem>>
    %59 = arith.addf %58, %47 : f32
    %c0_15 = arith.constant 0 : index
    %60 = memref.load %arg4[%c0_15] : memref<3xf32, #tpu.memory_space<smem>>
    memref.store %59, %arg4[%c0_15] : memref<3xf32, #tpu.memory_space<smem>>
    %c1 = arith.constant 1 : index
    %61 = memref.load %arg4[%c1] : memref<3xf32, #tpu.memory_space<smem>>
    %62 = arith.addf %61, %53 : f32
    %c1_16 = arith.constant 1 : index
    %63 = memref.load %arg4[%c1_16] : memref<3xf32, #tpu.memory_space<smem>>
    memref.store %62, %arg4[%c1_16] : memref<3xf32, #tpu.memory_space<smem>>
    %c2 = arith.constant 2 : index
    %64 = memref.load %arg4[%c2] : memref<3xf32, #tpu.memory_space<smem>>
    %65 = arith.addf %64, %57 : f32
    %c2_17 = arith.constant 2 : index
    %66 = memref.load %arg4[%c2_17] : memref<3xf32, #tpu.memory_space<smem>>
    memref.store %65, %arg4[%c2_17] : memref<3xf32, #tpu.memory_space<smem>>
    %c2_i32 = arith.constant 2 : i32
    %67 = arith.cmpi eq, %arg0, %c2_i32 : i32
    %68 = arith.extui %67 : i1 to i32
    %c0_i32_18 = arith.constant 0 : i32
    %69 = arith.cmpi ne, %68, %c0_i32_18 : i32
    scf.if %69 {
      %c0_19 = arith.constant 0 : index
      %70 = memref.load %arg4[%c0_19] : memref<3xf32, #tpu.memory_space<smem>>
      %cst_20 = arith.constant 0.000000e+00 : f32
      %71 = arith.subf %cst_20, %70 : f32
      %cst_21 = arith.constant 2.000000e+01 : f32
      %72 = arith.divf %71, %cst_21 : f32
      %c1_22 = arith.constant 1 : index
      %73 = memref.load %arg4[%c1_22] : memref<3xf32, #tpu.memory_space<smem>>
      %c2_23 = arith.constant 2 : index
      %74 = memref.load %arg4[%c2_23] : memref<3xf32, #tpu.memory_space<smem>>
      %75 = arith.divf %73, %74 : f32
      %cst_24 = arith.constant 3.125000e-03 : f32
      %76 = arith.mulf %72, %cst_24 : f32
      %cst_25 = arith.constant 0.899999976 : f32
      %77 = arith.mulf %cst_25, %75 : f32
      %78 = arith.addf %76, %77 : f32
      %c0_26 = arith.constant 0 : index
      %c0_27 = arith.constant 0 : index
      %79 = memref.load %arg3[%c0_26, %c0_27] : memref<1x1xf32, #tpu.memory_space<smem>>
      memref.store %78, %arg3[%c0_26, %c0_27] : memref<1x1xf32, #tpu.memory_space<smem>>
    } else {
    }
    return
  }
  func.func @transform_0(%arg0: i32) -> (i32, i32) {
    %c0_i32 = arith.constant 0 : i32
    %c0_i32_0 = arith.constant 0 : i32
    return %arg0, %c0_i32 : i32, i32
  }
  func.func @transform_1(%arg0: i32) -> (i32, i32) {
    %c0_i32 = arith.constant 0 : i32
    %c0_i32_0 = arith.constant 0 : i32
    return %arg0, %c0_i32 : i32, i32
  }
  func.func @transform_2(%arg0: i32) -> (i32, i32) {
    %c0_i32 = arith.constant 0 : i32
    %c0_i32_0 = arith.constant 0 : i32
    %c0_i32_1 = arith.constant 0 : i32
    return %c0_i32, %c0_i32_0 : i32, i32
  }
}

</mosaic_0001>

<llo_original>
// kernel: tpu_custom_call.1
$region0: #{tpu_custom_call.1}
  #allocation0 [shape = 'u32[]', space=smem, size = 0x4, offset = 0x4, fixed_abs, tag = 'smem constant byte address 0x4 - core index']
  #allocation1 [shape = 'u32[72,128]{1,0:T(1,128)}', space=vmem, size = 0x9000, scoped, tag = 'internal scratch']
  #allocation2 [shape = 'f32[3]{0:T(128)}', space=smem, size = 0x200, scoped, tag = 'scratch operand']
  %s0 = inlined_call_operand.vmem [shape: f32[20,32], index: 0, kind: input, shape index: {}]
  %s1 = inlined_call_operand.vmem [shape: s32[20,1], index: 1, kind: input, shape index: {}]
  %s2 = inlined_call_operand.hbm [shape: f32[1,1], index: 2, kind: output, shape index: {}]
  %s3 = sld [smem:[#allocation0]]
  $region49: #{tpu_custom_call.1} parent=0
    _
  %s5 = ssub.s32 1, %s3
  %s6 = scalar_select 0, %s5, %s3
  $region1: #{tpu_custom_call.1} parent=0
    #allocation3 [shape = 'u8[512]{0}', space=smem, size = 0x200, scoped, tag = 'output window, operand 0, single buffered']
    #allocation4 [shape = 's32[2]{0}', space=sflag, size = 0x8, scoped, tag = 'scoped memory for tpu_custom_call.1']
    %7 = vsyncpa [#allocation4], 0
    loop: start=0, step=1, limit=5
    $region2: #{tpu_custom_call.1} parent=1 // loop_pre_header
      _
    $region3: #{tpu_custom_call.1} parent=1 // loop_header
      %s9 = sphi 0, %s13
      %p10 = scmp.ge.s32.totalorder %s9, 5
      %s19 = sphi 0, %s21
      %s22 = sphi 0, %s19
      %s23 = sphi 0, %s22
      %s39 = sphi 0, %s23
      %s45 = sphi 0, %s47
      %s48 = sphi 0, %s45
      %s49 = sphi 0, %s48
      %s65 = sphi 0, %s49
      %s69 = sphi 0, %s69
      %s71 = sphi 0, %s69
      %s72 = sphi 0, %s71
      %s86 = sphi 0, %s72
    $region4: #{tpu_custom_call.1} parent=1 // loop_header_branch
      %12 = sbr.rel (%p10) target = $region8
    $region5: #{tpu_custom_call.1} parent=1 // loop_body
      %s14 = ssub.s32 %s9, 1
      %s15 = ssub.s32 %s9, 2
      %s16 = sadd.s32 %s9, 1
      %s17 = ssub.s32 %s9, %s16
      %p18 = scmp.eq.s32.totalorder %s17, 0
      %s20 = sadd.s32 %s19, 1
      %s21 = scalar_select %p18, %s19, %s20
      %p24 = pneg %p18
      %p25 = scmp.eq.s32.totalorder %s9, 2
      %p26 = por %p24, %p25
      %p27 = scmp.ne.s32.totalorder %s19, %s22
      %p28 = scmp.eq.s32.totalorder %s9, 0
      %p29 = por %p27, %p28
      %p30 = scmp.ne.s32.totalorder %s19, %s22
      %p31 = scmp.eq.s32.totalorder %s14, 2
      %p32 = por %p30, %p31
      %p33 = scmp.ne.s32.totalorder %s22, %s23
      %p34 = scmp.eq.s32.totalorder %s14, 0
      %p35 = por %p33, %p34
      %p36 = scmp.ne.s32.totalorder %s22, %s23
      %p37 = scmp.eq.s32.totalorder %s15, 2
      %p38 = por %p36, %p37
      %p40 = scmp.ne.s32.totalorder %s23, %s39
      %p41 = scmp.eq.s32.totalorder %s15, 0
      %p42 = por %p40, %p41
      %s43 = ssub.s32 %s9, %s16
      %p44 = scmp.eq.s32.totalorder %s43, 0
      %s46 = sadd.s32 %s45, 1
      %s47 = scalar_select %p44, %s45, %s46
      %p50 = pneg %p44
      %p51 = scmp.eq.s32.totalorder %s9, 2
      %p52 = por %p50, %p51
      %p53 = scmp.ne.s32.totalorder %s45, %s48
      %p54 = scmp.eq.s32.totalorder %s9, 0
      %p55 = por %p53, %p54
      %p56 = scmp.ne.s32.totalorder %s45, %s48
      %p57 = scmp.eq.s32.totalorder %s14, 2
      %p58 = por %p56, %p57
      %p59 = scmp.ne.s32.totalorder %s48, %s49
      %p60 = scmp.eq.s32.totalorder %s14, 0
      %p61 = por %p59, %p60
      %p62 = scmp.ne.s32.totalorder %s48, %s49
      %p63 = scmp.eq.s32.totalorder %s15, 2
      %p64 = por %p62, %p63
      %p66 = scmp.ne.s32.totalorder %s49, %s65
      %p67 = scmp.eq.s32.totalorder %s15, 0
      %p68 = por %p66, %p67
      %s70 = sadd.s32 %s69, 1
      %p73 = scmp.eq.s32.totalorder %s9, 2
      %p74 = scmp.ne.s32.totalorder %s69, %s71
      %p75 = scmp.eq.s32.totalorder %s9, 0
      %p76 = por %p74, %p75
      %p77 = scmp.ne.s32.totalorder %s69, %s71
      %p78 = scmp.eq.s32.totalorder %s14, 2
      %p79 = por %p77, %p78
      %p80 = scmp.ne.s32.totalorder %s71, %s72
      %p81 = scmp.eq.s32.totalorder %s14, 0
      %p82 = por %p80, %p81
      %p83 = scmp.ne.s32.totalorder %s71, %s72
      %p84 = scmp.eq.s32.totalorder %s15, 2
      %p85 = por %p83, %p84
      %p87 = scmp.ne.s32.totalorder %s72, %s86
      %p88 = scmp.eq.s32.totalorder %s15, 0
      %p89 = por %p87, %p88
      %p90 = scmp.le.s32.totalorder 1, %s9
      %p91 = scmp.lt.s32.totalorder %s9, 4
      %p92 = pnand %p90, %p91
      %p93 = pneg %p92
      // Predicated region
      $region9: #{tpu_custom_call.1} parent=5 // pred_check
        _
      $region10: #{tpu_custom_call.1} parent=5 // pred_check_branch
        %95 = sbr.rel (%p92) target = $region12
      $region11: #{tpu_custom_call.1} parent=5 // pred_region
        %s96 = ssub.s32 %s9, 1
      $region12: #{tpu_custom_call.1} parent=5 // pred_fallthru
        _
      %p97 = scmp.lt.s32.totalorder %s9, 3
      // Predicated region
      $region13: #{tpu_custom_call.1} parent=5 // pred_check
        %p98 = pneg %p97
      $region14: #{tpu_custom_call.1} parent=5 // pred_check_branch
        %100 = sbr.rel (%p98) target = $region16
      $region15: #{tpu_custom_call.1} parent=5 // pred_region
        // Predicated region
        $region17: #{tpu_custom_call.1} parent=15 // pred_check
          %p101 = pneg %p29
        $region18: #{tpu_custom_call.1} parent=15 // pred_check_branch
          %103 = sbr.rel (%p101) target = $region20
        $region19: #{tpu_custom_call.1} parent=15 // pred_region
          %p104 = scmp.lt.s32.totalorder %s9, 2
          %s105 = scalar_select %p104, %s9, 2
          %s106 = smul.addr %s105, 8
          %s107 = scalar_lea.vmem %s0, %s106
        $region20: #{tpu_custom_call.1} parent=15 // pred_fallthru
          _
        // Predicated region
        $region21: #{tpu_custom_call.1} parent=15 // pred_check
          %p108 = pneg %p55
        $region22: #{tpu_custom_call.1} parent=15 // pred_check_branch
          %110 = sbr.rel (%p108) target = $region24
        $region23: #{tpu_custom_call.1} parent=15 // pred_region
          %p111 = scmp.lt.s32.totalorder %s9, 2
          %s112 = scalar_select %p111, %s9, 2
          %s113 = smul.addr %s112, 8
          %s114 = scalar_lea.vmem %s1, %s113
        $region24: #{tpu_custom_call.1} parent=15 // pred_fallthru
          _
      $region16: #{tpu_custom_call.1} parent=5 // pred_fallthru
        _
      %p115 = scmp.le.s32.totalorder 1, %s9
      %p116 = scmp.lt.s32.totalorder %s9, 4
      %p117 = pnand %p115, %p116
      %p118 = pneg %p117
      // Predicated region
      $region25: #{tpu_custom_call.1} parent=5 // pred_check
        _
      $region26: #{tpu_custom_call.1} parent=5 // pred_check_branch
        %120 = sbr.rel (%p117) target = $region28
      $region27: #{tpu_custom_call.1} parent=5 // pred_region
        %s121 = ssub.s32 %s9, 1
        %p122 = scmp.lt.s32.totalorder %s14, 2
        %s123 = scalar_select %p122, %s14, 2
        %s124 = smul.addr %s123, 8
        %s125 = scalar_lea.vmem %s0, %s124
        %p126 = pneg %p35
        %p127 = pneg %p32
        %p128 = scmp.lt.s32.totalorder %s14, 2
        %s129 = scalar_select %p128, %s14, 2
        %s130 = smul.addr %s129, 8
        %s131 = scalar_lea.vmem %s1, %s130
        %p132 = pneg %p61
        %p133 = pneg %p58
        %p134 = pneg %p82
        %p135 = pneg %p79
        %p136 = scmp.lt.s32.totalorder %s14, 2
        %s137 = scalar_select %p136, %s14, 2
        %s138 = smul.addr %s137, 8
        %s139 = scalar_lea.vmem %s0, %s138
        %p140 = scmp.lt.s32.totalorder %s14, 2
        %s141 = scalar_select %p140, %s14, 2
        %s142 = smul.addr %s141, 8
        %s143 = scalar_lea.vmem %s1, %s142
        %p144 = scmp.eq.s32.totalorder %s14, 0
        // Predicated region
        $region29: #{tpu_custom_call.1} parent=27 // pred_check
          %p145 = pneg %p144
        $region30: #{tpu_custom_call.1} parent=27 // pred_check_branch
          %147 = sbr.rel (%p145) target = $region32
        $region31: #{tpu_custom_call.1} parent=27 // pred_region
          %s148 = scalar_lea.smem [#allocation2], 0
          %149 = sst [smem:[%s148]] 0.0
          %s150 = scalar_lea.smem [#allocation2], 1
          %151 = sst [smem:[%s150]] 0.0
          %s152 = scalar_lea.smem [#allocation2], 2
          %153 = sst [smem:[%s152]] 0.0
        $region32: #{tpu_custom_call.1} parent=27 // pred_fallthru
          _
        %v154 = vld [vmem:[%s139] sm:$0xff]
        %v155 = vld [vmem:[%s143] sm:$0xff]
        %s156 = smul.u32 %s14, 8
        %v157 = vlaneseq
        %v158 = vshrl.u32 %v157, 7
        %v159 = vstv %s156
        %v160 = vadd.s32 %v159, %v158
        %vm161 = vcmp.lt.s32.totalorder %v160, 20
        %v162 = vsel %vm161, 1, 0
        %vm163 = vcmp.eq.s32.totalorder %v162, 1
        %v164 = vsel %vm163, %v154, 0.0
        %v165 = vcvt.s32.f32 %v162
        %vm166 = vcmp.ne.s32.totalorder %v155, 4294967196
        %vm167 = vmand %vm166, %vm161
        %vm168 = vcmask 261120
        %v169 = vsel %vm168, %v164, -inf
        %170 = vmax.xlane.f32.xlu0 %v169
        %v171 = vpop.xlane.xlu0 %170
        %v172 = vsub.f32 %v164, %v171
        %v173 = vmul.f32 %v172, 1.442695
        %v174 = vpow.pop %v173
        %v175 = vsel %vm168, %v174, 0.0
        %176 = vadd.xlane.f32.xlu0 %v175
        %v177 = vpop.xlane.xlu0 %176
        %v178 = vlog2.pop %v177
        %v179 = vmul.f32 %v178, 0.6931472
        %v180 = vsel %vm168, %v172, 0.0
        %181 = vadd.xlane.f32.xlu0 %v180
        %v182 = vpop.xlane.xlu0 %181
        %v183 = vmul.f32 %v179, 32.0
        %v184 = vsub.f32 %v182, %v183
        %v185 = vlaneseq
        %v186 = vand.u32 %v185, 127
        %187 = vset.pattern.permute.xlu0 0
        %188 = vperm.xlu0 %187, %v155
        %v189 = vpop.permute.xlu0 %188
        %vm190 = vcmp.eq.s32.totalorder %v186, %v189
        %v191 = vsel %vm190, %v172, 0.0
        %v192 = vsel %vm168, %v191, 0.0
        %193 = vadd.xlane.f32.xlu0 %v192
        %v194 = vpop.xlane.xlu0 %193
        %v195 = vsub.f32 %v194, %v179
        %v196 = vsel %vm167, 1, 0
        %v197 = vcvt.s32.f32 %v196
        %v198 = vmul.f32 %v184, %v165
        %vm199 = vcmask 7168
        %v200 = vsel %vm199, %v198, 0.0
        %201 = vadd.xlane.f32.xlu0 %v200
        %v202 = vpop.xlane.xlu0 %201
        %v203 = vrot.slane %v202, 4
        %v204 = vadd.f32 %v202, %v203
        %v205 = vrot.slane %v204, 2
        %v206 = vadd.f32 %v204, %v205
        %v207 = vrot.slane %v206, 1
        %v208 = vadd.f32 %v206, %v207
        %s209 = vtos %v208
        %v210 = vmul.f32 %v195, %v197
        %v211 = vsel %vm199, %v210, 0.0
        %212 = vadd.xlane.f32.xlu0 %v211
        %v213 = vpop.xlane.xlu0 %212
        %v214 = vrot.slane %v213, 4
        %v215 = vadd.f32 %v213, %v214
        %v216 = vrot.slane %v215, 2
        %v217 = vadd.f32 %v215, %v216
        %v218 = vrot.slane %v217, 1
        %v219 = vadd.f32 %v217, %v218
        %s220 = vtos %v219
        %s221 = ssub.f32 0.0, %s220
        %v222 = vsel %vm199, %v197, 0.0
        %223 = vadd.xlane.f32.xlu0 %v222
        %v224 = vpop.xlane.xlu0 %223
        %v225 = vrot.slane %v224, 4
        %v226 = vadd.f32 %v224, %v225
        %v227 = vrot.slane %v226, 2
        %v228 = vadd.f32 %v226, %v227
        %v229 = vrot.slane %v228, 1
        %v230 = vadd.f32 %v228, %v229
        %s231 = vtos %v230
        %s232 = sld [smem:[#allocation2]]
        %s233 = sadd.f32 %s232, %s209
        %s234 = scalar_lea.smem [#allocation2], 0
        %235 = sst [smem:[%s234]] %s233
        %s236 = sld [smem:[#allocation2 + $0x1]]
        %s237 = sadd.f32 %s236, %s221
        %s238 = scalar_lea.smem [#allocation2], 1
        %239 = sst [smem:[%s238]] %s237
        %s240 = sld [smem:[#allocation2 + $0x2]]
        %s241 = sadd.f32 %s240, %s231
        %s242 = scalar_lea.smem [#allocation2], 2
        %243 = sst [smem:[%s242]] %s241
        %p244 = scmp.eq.s32.totalorder %s14, 2
        // Predicated region
        $region33: #{tpu_custom_call.1} parent=27 // pred_check
          %p245 = pneg %p244
        $region34: #{tpu_custom_call.1} parent=27 // pred_check_branch
          %247 = sbr.rel (%p245) target = $region36
        $region35: #{tpu_custom_call.1} parent=27 // pred_region
          %s248 = sld [smem:[#allocation2]]
          %s249 = ssub.f32 0.0, %s248
          %v250 = vrcp.pop 20.0
          %v251 = vmul.f32 20.0, %v250
          %v252 = vsub.f32 1.0, %v251
          %v253 = vmul.f32 %v250, %v252
          %v254 = vadd.f32 %v250, %v253
          %vm255 = vweird.f32 %v250
          %v256 = vsel %vm255, %v250, %v254
          %s257 = vtos %v256
          %s258 = smul.f32 %s249, %s257
          %s259 = sld [smem:[#allocation2 + $0x1]]
          %s260 = sld [smem:[#allocation2 + $0x2]]
          %v261 = vstv %s260
          %v262 = vrcp.pop %v261
          %v263 = vmul.f32 %v261, %v262
          %v264 = vsub.f32 1.0, %v263
          %v265 = vmul.f32 %v262, %v264
          %v266 = vadd.f32 %v262, %v265
          %vm267 = vweird.f32 %v261
          %vm268 = vweird.f32 %v262
          %vm269 = vmor %vm267, %vm268
          %v270 = vsel %vm269, %v262, %v266
          %v271 = vand.u32 2147483647, %v261
          %vm272 = vcmp.eq.f32.partialorder %v271, 8.507059e+37
          %v273 = vand.u32 %v261, 2147483648
          %v274 = vor.u32 1.1754944e-38, %v273
          %v275 = vsel %vm272, %v274, %v270
          %s276 = vtos %v275
          %s277 = smul.f32 %s259, %s276
          %s278 = smul.f32 %s258, 0.003125
          %s279 = smul.f32 %s277, 0.9
          %s280 = sadd.f32 %s278, %s279
          %s281 = scalar_lea.smem [#allocation3], 0
          %282 = sst [smem:[%s281]] %s280
        $region36: #{tpu_custom_call.1} parent=27 // pred_fallthru
          _
        // Predicated region
        $region37: #{tpu_custom_call.1} parent=27 // pred_check
          %p283 = pneg %p79
        $region38: #{tpu_custom_call.1} parent=27 // pred_check_branch
          %285 = sbr.rel (%p283) target = $region40
        $region39: #{tpu_custom_call.1} parent=27 // pred_region
          %287 = vsyncadd [#allocation4], 0
          %s289 = sshll.u32 %s2, 4
          %s290 = int_to_ptr.hbm [resolvable:$true] %s289
          %292 = dma.smem_to_hbm [#allocation3], 16, %s290, [#allocation4]
        $region40: #{tpu_custom_call.1} parent=27 // pred_fallthru
          _
        // Predicated region
        $region41: #{tpu_custom_call.1} parent=27 // pred_check
          %p293 = pneg %p79
        $region42: #{tpu_custom_call.1} parent=27 // pred_check_branch
          %295 = sbr.rel (%p293) target = $region44
        $region43: #{tpu_custom_call.1} parent=27 // pred_region
          %297 = dma.done [#allocation4], 16
        $region44: #{tpu_custom_call.1} parent=27 // pred_fallthru
          _
        %298 = sfence
      $region28: #{tpu_custom_call.1} parent=5 // pred_fallthru
        _
      %p299 = scmp.le.s32.totalorder 2, %s9
      // Predicated region
      $region45: #{tpu_custom_call.1} parent=5 // pred_check
        %p300 = pneg %p299
      $region46: #{tpu_custom_call.1} parent=5 // pred_check_branch
        %302 = sbr.rel (%p300) target = $region48
      $region47: #{tpu_custom_call.1} parent=5 // pred_region
        %s303 = ssub.s32 %s9, 2
      $region48: #{tpu_custom_call.1} parent=5 // pred_fallthru
        _
    $region6: #{tpu_custom_call.1} parent=1 // loop_footer
      %s13 = sadd.s32 1, %s9
    $region7: #{tpu_custom_call.1} parent=1 // loop_footer_branch
      %8 = sbr.rel target = $region3
    $region8: #{tpu_custom_call.1} parent=1 // loop_exit
      _
    %304 = vsyncpa [#allocation4], 1
    %s305 = scalar_lea.sflag [#allocation4], 1
    %306 = vsyncpa %s305, 1

</llo_original>
